<compile_context>
chip_gen: v5e
topology: v5e:2x2
jax: 0.10.0
libtpu: 0.0.40
codegen_flags: <defaults>
</compile_context>

<pallas_src>
import functools

import jax
import jax.numpy as jnp
from jax.experimental import pallas as pl
from jax.experimental.pallas import tpu as pltpu


def _mlp3_kernel(xT_ref, w1_ref, b1_ref, w2_ref, b2_ref, w3_ref, b3_ref,
                 w4_ref, b4_ref, oT_ref):
    """One grid step: full 4-layer MLP on a (n_x, block_m) tile of X^T.

    Weights are in torch nn.Linear layout (out_features, in_features), biases are
    (out_features, 1) so they broadcast across the lane (observation) axis.
    """
    x = xT_ref[...]                                                   # (n_x, bm) f32

    h = jnp.dot(w1_ref[...], x, preferred_element_type=jnp.float32) + b1_ref[...]
    h = jnp.maximum(h, 0.0)                                           # (h1, bm)

    h = jnp.dot(w2_ref[...], h, preferred_element_type=jnp.float32) + b2_ref[...]
    h = jnp.maximum(h, 0.0)                                           # (h2, bm)

    h = jnp.dot(w3_ref[...], h, preferred_element_type=jnp.float32) + b3_ref[...]
    h = jnp.maximum(h, 0.0)                                           # (n_y, bm)

    y = jnp.dot(w4_ref[...], h, preferred_element_type=jnp.float32) + b4_ref[...]
    oT_ref[...] = y.astype(oT_ref.dtype)                              # (n_y, bm)


@functools.partial(jax.jit, static_argnames=("block_m",))
def synthetic3layer_forward(X, params, *, block_m=2048):
    """X: (n_obs, n_x) float32. params: torch-layout weights (out,in), biases (out,)."""
    n_obs, n_x = X.shape
    w1, b1 = params["w1"], params["b1"]
    w2, b2 = params["w2"], params["b2"]
    w3, b3 = params["w3"], params["b3"]
    w4, b4 = params["w4"], params["b4"]
    h1, h2, n_y = w1.shape[0], w2.shape[0], w4.shape[0]

    # Lane-aligned observation block: multiple of 128, no larger than needed.
    n_obs_128 = pl.cdiv(n_obs, 128) * 128
    bm = max(128, (block_m // 128) * 128)
    bm = min(bm, n_obs_128)
    n_pad = pl.cdiv(n_obs, bm) * bm

    # Present X transposed (obs on lanes); zero-pad the tail block. Padded columns
    # produce garbage-but-finite outputs that are sliced off below.
    xT = X.T
    if n_pad != n_obs:
        xT = jnp.pad(xT, ((0, 0), (0, n_pad - n_obs)))

    # Column-vector biases for lane broadcasting inside the kernel.
    b1c = b1.reshape(h1, 1)
    b2c = b2.reshape(h2, 1)
    b3c = b3.reshape(n_y, 1)
    b4c = b4.reshape(n_y, 1)

    grid = (n_pad // bm,)

    in_specs = [
        pl.BlockSpec((n_x, bm), lambda i: (0, i)),   # X^T tile (lane-dense on obs)
        pl.BlockSpec((h1, n_x), lambda i: (0, 0)),   # w1 (out, in)
        pl.BlockSpec((h1, 1), lambda i: (0, 0)),     # b1
        pl.BlockSpec((h2, h1), lambda i: (0, 0)),    # w2
        pl.BlockSpec((h2, 1), lambda i: (0, 0)),     # b2
        pl.BlockSpec((n_y, h2), lambda i: (0, 0)),   # w3
        pl.BlockSpec((n_y, 1), lambda i: (0, 0)),    # b3
        pl.BlockSpec((n_y, n_y), lambda i: (0, 0)),  # w4
        pl.BlockSpec((n_y, 1), lambda i: (0, 0)),    # b4
    ]
    out_specs = pl.BlockSpec((n_y, bm), lambda i: (0, i))

    yT = pl.pallas_call(
        _mlp3_kernel,
        out_shape=jax.ShapeDtypeStruct((n_y, n_pad), X.dtype),
        grid=grid,
        in_specs=in_specs,
        out_specs=out_specs,
        compiler_params=pltpu.CompilerParams(
            dimension_semantics=("parallel",)),
    )(xT, w1, b1c, w2, b2c, w3, b3c, w4, b4c)

    # Back to the module's (n_obs, n_y) layout (wrapper-side layout plumbing).
    return yT[:, :n_obs].T


def init_params(n_x, n_y, seed=0):
    """Deterministic parameter init matching the torch module's layer shapes.

    Weights are stored in torch nn.Linear layout: (out_features, in_features).
    """
    h1 = int(0.5 * (n_x + n_y))
    h2 = int(0.6 * (n_x + n_y))
    key = jax.random.PRNGKey(seed)
    ks = jax.random.split(key, 8)

    def lin(kw, kb, fan_in, fan_out):
        # Uniform(-1/sqrt(fan_in), 1/sqrt(fan_in)), same family as torch default.
        bound = 1.0 / jnp.sqrt(jnp.float32(fan_in))
        w = jax.random.uniform(kw, (fan_out, fan_in), jnp.float32, -bound, bound)
        b = jax.random.uniform(kb, (fan_out,), jnp.float32, -bound, bound)
        return w, b

    w1, b1 = lin(ks[0], ks[1], n_x, h1)
    w2, b2 = lin(ks[2], ks[3], h1, h2)
    w3, b3 = lin(ks[4], ks[5], h2, n_y)
    w4, b4 = lin(ks[6], ks[7], n_y, n_y)
    return {"w1": w1, "b1": b1, "w2": w2, "b2": b2,
            "w3": w3, "b3": b3, "w4": w4, "b4": b4}


def reference_forward(X, p):
    """Pure-JAX reference of the torch forward pass (weights in torch (out,in) layout)."""
    h = jnp.maximum(X @ p["w1"].T + p["b1"], 0.0)
    h = jnp.maximum(h @ p["w2"].T + p["b2"], 0.0)
    h = jnp.maximum(h @ p["w3"].T + p["b3"], 0.0)
    return h @ p["w4"].T + p["b4"]


if __name__ == "__main__":
    n_x, n_y = 16, 8
    params = init_params(n_x, n_y, seed=0)
    key = jax.random.PRNGKey(0)

    # Small case (n_obs < 128): block clamps to one lane-aligned tile, grid = 1.
    n_obs = 32
    X = jax.random.normal(jax.random.fold_in(key, 0), (n_obs, n_x), dtype=jnp.float32)
    Y = jax.block_until_ready(synthetic3layer_forward(X, params))
    Y_ref = reference_forward(X, params)
    assert Y.shape == (n_obs, n_y)
    assert jnp.allclose(Y, Y_ref, atol=1e-5, rtol=1e-5), "mismatch vs reference (small)"

    # Ragged case (n_obs not a multiple of the block): exercises padding + multi-step grid.
    n_obs2 = 1000
    X2 = jax.random.normal(jax.random.fold_in(key, 1), (n_obs2, n_x), dtype=jnp.float32)
    Y2 = jax.block_until_ready(synthetic3layer_forward(X2, params, block_m=256))
    Y2_ref = reference_forward(X2, params)
    assert Y2.shape == (n_obs2, n_y)
    assert jnp.allclose(Y2, Y2_ref, atol=1e-5, rtol=1e-5), "mismatch vs reference (ragged)"

    print("KERNEL_OK")
</pallas_src>

<mosaic_0001>
module attributes {stable_mosaic.version = 11 : i64} {
  func.func @_mlp3_kernel(%arg0: i32, %arg1: memref<16x128xf32, #tpu.memory_space<vmem>>, %arg2: memref<12x16xf32, #tpu.memory_space<vmem>>, %arg3: memref<12x1xf32, #tpu.memory_space<vmem>>, %arg4: memref<14x12xf32, #tpu.memory_space<vmem>>, %arg5: memref<14x1xf32, #tpu.memory_space<vmem>>, %arg6: memref<8x14xf32, #tpu.memory_space<vmem>>, %arg7: memref<8x1xf32, #tpu.memory_space<vmem>>, %arg8: memref<8x8xf32, #tpu.memory_space<vmem>>, %arg9: memref<8x1xf32, #tpu.memory_space<vmem>>, %arg10: memref<8x128xf32, #tpu.memory_space<vmem>>) attributes {dimension_semantics = [#tpu.dimension_semantics<parallel>], iteration_bounds = array<i64: 1>, scalar_prefetch = 0 : i64, scratch_operands = 0 : i64, tpu.core_type = #tpu.core_type<tc>, window_params = [{transform_indices = @transform_0, window_bounds = array<i64: 16, 128>}, {pipeline_mode = #tpu.pipeline_mode<synchronous>, transform_indices = @transform_1, window_bounds = array<i64: 12, 16>}, {pipeline_mode = #tpu.pipeline_mode<synchronous>, transform_indices = @transform_2, window_bounds = array<i64: 12, 1>}, {pipeline_mode = #tpu.pipeline_mode<synchronous>, transform_indices = @transform_3, window_bounds = array<i64: 14, 12>}, {pipeline_mode = #tpu.pipeline_mode<synchronous>, transform_indices = @transform_4, window_bounds = array<i64: 14, 1>}, {pipeline_mode = #tpu.pipeline_mode<synchronous>, transform_indices = @transform_5, window_bounds = array<i64: 8, 14>}, {pipeline_mode = #tpu.pipeline_mode<synchronous>, transform_indices = @transform_6, window_bounds = array<i64: 8, 1>}, {pipeline_mode = #tpu.pipeline_mode<synchronous>, transform_indices = @transform_7, window_bounds = array<i64: 8, 8>}, {pipeline_mode = #tpu.pipeline_mode<synchronous>, transform_indices = @transform_8, window_bounds = array<i64: 8, 1>}, {transform_indices = @transform_9, window_bounds = array<i64: 8, 128>}]} {
    %c0 = arith.constant 0 : index
    %c0_0 = arith.constant 0 : index
    %0 = vector.load %arg1[%c0, %c0_0] : memref<16x128xf32, #tpu.memory_space<vmem>>, vector<16x128xf32>
    %c0_1 = arith.constant 0 : index
    %c0_2 = arith.constant 0 : index
    %1 = vector.load %arg2[%c0_1, %c0_2] : memref<12x16xf32, #tpu.memory_space<vmem>>, vector<12x16xf32>
    %cst = arith.constant dense<0.000000e+00> : vector<12x128xf32>
    %2 = tpu.matmul %1, %0, %cst {dimension_numbers = #tpu.dot_dimension_numbers<[1], [0], [0], [1], [0, 0, 1, 1], [], []>} : vector<12x16xf32>, vector<16x128xf32>, vector<12x128xf32> -> vector<12x128xf32>
    %c0_3 = arith.constant 0 : index
    %c0_4 = arith.constant 0 : index
    %3 = vector.load %arg3[%c0_3, %c0_4] : memref<12x1xf32, #tpu.memory_space<vmem>>, vector<12x1xf32>
    %4 = vector.broadcast %3 : vector<12x1xf32> to vector<12x128xf32>
    %5 = arith.addf %2, %4 : vector<12x128xf32>
    %cst_5 = arith.constant 0.000000e+00 : f32
    %6 = vector.broadcast %cst_5 : f32 to vector<12x128xf32>
    %7 = arith.maximumf %5, %6 : vector<12x128xf32>
    %c0_6 = arith.constant 0 : index
    %c0_7 = arith.constant 0 : index
    %8 = vector.load %arg4[%c0_6, %c0_7] : memref<14x12xf32, #tpu.memory_space<vmem>>, vector<14x12xf32>
    %cst_8 = arith.constant dense<0.000000e+00> : vector<14x128xf32>
    %9 = tpu.matmul %8, %7, %cst_8 {dimension_numbers = #tpu.dot_dimension_numbers<[1], [0], [0], [1], [0, 0, 1, 1], [], []>} : vector<14x12xf32>, vector<12x128xf32>, vector<14x128xf32> -> vector<14x128xf32>
    %c0_9 = arith.constant 0 : index
    %c0_10 = arith.constant 0 : index
    %10 = vector.load %arg5[%c0_9, %c0_10] : memref<14x1xf32, #tpu.memory_space<vmem>>, vector<14x1xf32>
    %11 = vector.broadcast %10 : vector<14x1xf32> to vector<14x128xf32>
    %12 = arith.addf %9, %11 : vector<14x128xf32>
    %cst_11 = arith.constant 0.000000e+00 : f32
    %13 = vector.broadcast %cst_11 : f32 to vector<14x128xf32>
    %14 = arith.maximumf %12, %13 : vector<14x128xf32>
    %c0_12 = arith.constant 0 : index
    %c0_13 = arith.constant 0 : index
    %15 = vector.load %arg6[%c0_12, %c0_13] : memref<8x14xf32, #tpu.memory_space<vmem>>, vector<8x14xf32>
    %cst_14 = arith.constant dense<0.000000e+00> : vector<8x128xf32>
    %16 = tpu.matmul %15, %14, %cst_14 {dimension_numbers = #tpu.dot_dimension_numbers<[1], [0], [0], [1], [0, 0, 1, 1], [], []>} : vector<8x14xf32>, vector<14x128xf32>, vector<8x128xf32> -> vector<8x128xf32>
    %c0_15 = arith.constant 0 : index
    %c0_16 = arith.constant 0 : index
    %17 = vector.load %arg7[%c0_15, %c0_16] : memref<8x1xf32, #tpu.memory_space<vmem>>, vector<8x1xf32>
    %18 = vector.broadcast %17 : vector<8x1xf32> to vector<8x128xf32>
    %19 = arith.addf %16, %18 : vector<8x128xf32>
    %cst_17 = arith.constant 0.000000e+00 : f32
    %20 = vector.broadcast %cst_17 : f32 to vector<8x128xf32>
    %21 = arith.maximumf %19, %20 : vector<8x128xf32>
    %c0_18 = arith.constant 0 : index
    %c0_19 = arith.constant 0 : index
    %22 = vector.load %arg8[%c0_18, %c0_19] : memref<8x8xf32, #tpu.memory_space<vmem>>, vector<8x8xf32>
    %cst_20 = arith.constant dense<0.000000e+00> : vector<8x128xf32>
    %23 = tpu.matmul %22, %21, %cst_20 {dimension_numbers = #tpu.dot_dimension_numbers<[1], [0], [0], [1], [0, 0, 1, 1], [], []>} : vector<8x8xf32>, vector<8x128xf32>, vector<8x128xf32> -> vector<8x128xf32>
    %c0_21 = arith.constant 0 : index
    %c0_22 = arith.constant 0 : index
    %24 = vector.load %arg9[%c0_21, %c0_22] : memref<8x1xf32, #tpu.memory_space<vmem>>, vector<8x1xf32>
    %25 = vector.broadcast %24 : vector<8x1xf32> to vector<8x128xf32>
    %26 = arith.addf %23, %25 : vector<8x128xf32>
    %c0_23 = arith.constant 0 : index
    %c0_24 = arith.constant 0 : index
    %27 = vector.load %arg10[%c0_23, %c0_24] : memref<8x128xf32, #tpu.memory_space<vmem>>, vector<8x128xf32>
    tpu.vector_store %arg10[%c0_23, %c0_24], %26 {strides = array<i32>} : memref<8x128xf32, #tpu.memory_space<vmem>>, vector<8x128xf32>,
    return
  }
  func.func @transform_0(%arg0: i32) -> (i32, i32) {
    %c0_i32 = arith.constant 0 : i32
    %c0_i32_0 = arith.constant 0 : i32
    return %c0_i32, %arg0 : i32, i32
  }
  func.func @transform_1(%arg0: i32) -> (i32, i32) {
    %c0_i32 = arith.constant 0 : i32
    %c0_i32_0 = arith.constant 0 : i32
    %c0_i32_1 = arith.constant 0 : i32
    return %c0_i32, %c0_i32_0 : i32, i32
  }
  func.func @transform_2(%arg0: i32) -> (i32, i32) {
    %c0_i32 = arith.constant 0 : i32
    %c0_i32_0 = arith.constant 0 : i32
    %c0_i32_1 = arith.constant 0 : i32
    return %c0_i32, %c0_i32_0 : i32, i32
  }
  func.func @transform_3(%arg0: i32) -> (i32, i32) {
    %c0_i32 = arith.constant 0 : i32
    %c0_i32_0 = arith.constant 0 : i32
    %c0_i32_1 = arith.constant 0 : i32
    return %c0_i32, %c0_i32_0 : i32, i32
  }
  func.func @transform_4(%arg0: i32) -> (i32, i32) {
    %c0_i32 = arith.constant 0 : i32
    %c0_i32_0 = arith.constant 0 : i32
    %c0_i32_1 = arith.constant 0 : i32
    return %c0_i32, %c0_i32_0 : i32, i32
  }
  func.func @transform_5(%arg0: i32) -> (i32, i32) {
    %c0_i32 = arith.constant 0 : i32
    %c0_i32_0 = arith.constant 0 : i32
    %c0_i32_1 = arith.constant 0 : i32
    return %c0_i32, %c0_i32_0 : i32, i32
  }
  func.func @transform_6(%arg0: i32) -> (i32, i32) {
    %c0_i32 = arith.constant 0 : i32
    %c0_i32_0 = arith.constant 0 : i32
    %c0_i32_1 = arith.constant 0 : i32
    return %c0_i32, %c0_i32_0 : i32, i32
  }
  func.func @transform_7(%arg0: i32) -> (i32, i32) {
    %c0_i32 = arith.constant 0 : i32
    %c0_i32_0 = arith.constant 0 : i32
    %c0_i32_1 = arith.constant 0 : i32
    return %c0_i32, %c0_i32_0 : i32, i32
  }
  func.func @transform_8(%arg0: i32) -> (i32, i32) {
    %c0_i32 = arith.constant 0 : i32
    %c0_i32_0 = arith.constant 0 : i32
    %c0_i32_1 = arith.constant 0 : i32
    return %c0_i32, %c0_i32_0 : i32, i32
  }
  func.func @transform_9(%arg0: i32) -> (i32, i32) {
    %c0_i32 = arith.constant 0 : i32
    %c0_i32_0 = arith.constant 0 : i32
    return %c0_i32, %arg0 : i32, i32
  }
}

</mosaic_0001>

<llo_original>
// kernel: synthetic3layer_forward.1
$region0: #{synthetic3layer_forward.1}
  #allocation0 [shape = 'u32[]', space=smem, size = 0x4, offset = 0x4, fixed_abs, tag = 'smem constant byte address 0x4 - core index']
  #allocation1 [shape = 'u32[72,128]{1,0:T(1,128)}', space=vmem, size = 0x9000, scoped, tag = 'internal scratch']
  %s0 = inlined_call_operand.vmem [shape: f32[16,128], index: 0, kind: input, shape index: {}]
  %s1 = inlined_call_operand.vmem [shape: f32[12,16], index: 1, kind: input, shape index: {}]
  %s2 = inlined_call_operand.vmem [shape: f32[12,1], index: 2, kind: input, shape index: {}]
  %s3 = inlined_call_operand.vmem [shape: f32[14,12], index: 3, kind: input, shape index: {}]
  %s4 = inlined_call_operand.vmem [shape: f32[14,1], index: 4, kind: input, shape index: {}]
  %s5 = inlined_call_operand.vmem [shape: f32[8,14], index: 5, kind: input, shape index: {}]
  %s6 = inlined_call_operand.vmem [shape: f32[8,1], index: 6, kind: input, shape index: {}]
  %s7 = inlined_call_operand.vmem [shape: f32[8,8], index: 7, kind: input, shape index: {}]
  %s8 = inlined_call_operand.vmem [shape: f32[8,1], index: 8, kind: input, shape index: {}]
  %s9 = inlined_call_operand.vmem [shape: f32[8,128], index: 9, kind: output, shape index: {}]
  %s10 = sld [smem:[#allocation0]]
  $region46: #{synthetic3layer_forward.1} parent=0
    _
  %s12 = ssub.s32 1, %s10
  %s13 = scalar_select 0, %s12, %s10
  // Predicated region
  $region2: #{synthetic3layer_forward.1} parent=0 // pred_check
    _
  $region3: #{synthetic3layer_forward.1} parent=0 // pred_check_branch
    %15 = sbr.rel (0) target = $region5
  $region4: #{synthetic3layer_forward.1} parent=0 // pred_region
    _
  $region5: #{synthetic3layer_forward.1} parent=0 // pred_fallthru
    _
  // Predicated region
  $region6: #{synthetic3layer_forward.1} parent=0 // pred_check
    _
  $region7: #{synthetic3layer_forward.1} parent=0 // pred_check_branch
    %17 = sbr.rel (0) target = $region9
  $region8: #{synthetic3layer_forward.1} parent=0 // pred_region
    _
  $region9: #{synthetic3layer_forward.1} parent=0 // pred_fallthru
    _
  // Predicated region
  $region10: #{synthetic3layer_forward.1} parent=0 // pred_check
    _
  $region11: #{synthetic3layer_forward.1} parent=0 // pred_check_branch
    %19 = sbr.rel (0) target = $region13
  $region12: #{synthetic3layer_forward.1} parent=0 // pred_region
    _
  $region13: #{synthetic3layer_forward.1} parent=0 // pred_fallthru
    _
  // Predicated region
  $region14: #{synthetic3layer_forward.1} parent=0 // pred_check
    _
  $region15: #{synthetic3layer_forward.1} parent=0 // pred_check_branch
    %21 = sbr.rel (0) target = $region17
  $region16: #{synthetic3layer_forward.1} parent=0 // pred_region
    _
  $region17: #{synthetic3layer_forward.1} parent=0 // pred_fallthru
    _
  // Predicated region
  $region18: #{synthetic3layer_forward.1} parent=0 // pred_check
    _
  $region19: #{synthetic3layer_forward.1} parent=0 // pred_check_branch
    %23 = sbr.rel (0) target = $region21
  $region20: #{synthetic3layer_forward.1} parent=0 // pred_region
    _
  $region21: #{synthetic3layer_forward.1} parent=0 // pred_fallthru
    _
  // Predicated region
  $region22: #{synthetic3layer_forward.1} parent=0 // pred_check
    _
  $region23: #{synthetic3layer_forward.1} parent=0 // pred_check_branch
    %25 = sbr.rel (0) target = $region25
  $region24: #{synthetic3layer_forward.1} parent=0 // pred_region
    _
  $region25: #{synthetic3layer_forward.1} parent=0 // pred_fallthru
    _
  // Predicated region
  $region26: #{synthetic3layer_forward.1} parent=0 // pred_check
    _
  $region27: #{synthetic3layer_forward.1} parent=0 // pred_check_branch
    %27 = sbr.rel (0) target = $region29
  $region28: #{synthetic3layer_forward.1} parent=0 // pred_region
    _
  $region29: #{synthetic3layer_forward.1} parent=0 // pred_fallthru
    _
  // Predicated region
  $region30: #{synthetic3layer_forward.1} parent=0 // pred_check
    _
  $region31: #{synthetic3layer_forward.1} parent=0 // pred_check_branch
    %29 = sbr.rel (0) target = $region33
  $region32: #{synthetic3layer_forward.1} parent=0 // pred_region
    _
  $region33: #{synthetic3layer_forward.1} parent=0 // pred_fallthru
    _
  // Predicated region
  $region34: #{synthetic3layer_forward.1} parent=0 // pred_check
    _
  $region35: #{synthetic3layer_forward.1} parent=0 // pred_check_branch
    %31 = sbr.rel (0) target = $region37
  $region36: #{synthetic3layer_forward.1} parent=0 // pred_region
    _
  $region37: #{synthetic3layer_forward.1} parent=0 // pred_fallthru
    _
  %v32 = vld [vmem:[%s0] sm:$0xff]
  %v33 = vld [vmem:[%s0 + $0x8] sm:$0xff]
  %v34 = vld [vmem:[%s1] sm:$0xff]
  %v35 = vld [vmem:[%s1 + $0x8] sm:$0xf]
  %v36 = vld [vmem:[%s2] sm:$0xff]
  %v37 = vld [vmem:[%s2 + $0x8] sm:$0xf]
  %39 = vset.pattern.permute.xlu0 0
  %40 = vperm.xlu0 %39, %v36
  %v41 = vpop.permute.xlu0 %40
  %44 = vset.pattern.permute.xlu0 0
  %45 = vperm.xlu0 %44, %v37
  %v46 = vpop.permute.xlu0 %45
  %vm48 = vcmask 130048
  %v50 = vsel %vm48, %v34, 0
  %v53 = vsel %vm48, %v35, 0
  %55 = vmatpush.msra.mxu0 0.0
  %56 = vmatpush.msra.mxu0 0.0
  %57 = vmatpush.msra.mxu0 0.0
  %58 = vmatpush.msra.mxu0 0.0
  %59 = vmatpush.msra.mxu0 0.0
  %60 = vmatpush.msra.mxu0 0.0
  %61 = vmatpush.msra.mxu0 0.0
  %62 = vmatpush.msra.mxu0 0.0
  %63 = vmatpush.msra.mxu0 0.0
  %64 = vmatpush.msra.mxu0 0.0
  %65 = vmatpush.msra.mxu0 0.0
  %66 = vmatpush.msra.mxu0 0.0
  %67 = vmatpush.msra.mxu0 0.0
  %68 = vmatpush.msra.mxu0 0.0
  %69 = vmatpush.msra.mxu0 %v33
  %70 = vmatpush.msra.mxu0 %v32
  %71 = vmatmul.f32.gmra.mxu0 %v50
  %v72 = vpop.f32.mrf.mxu0
  %v73 = vadd.f32 %v41, %v72
  %74 = vmatmul.f32.gmra.mxu0 %v53
  %v75 = vpop.f32.mrf.mxu0
  %v76 = vadd.f32 %v46, %v75
  %77 = vdwg.mxu0
  %v78 = vmax.f32 %v73, 0.0
  %v79 = vmax.f32 %v76, 0.0
  %v80 = vld [vmem:[%s3] sm:$0xff]
  %v81 = vld [vmem:[%s3 + $0x8] sm:$0x3f]
  %v82 = vld [vmem:[%s4] sm:$0xff]
  %v83 = vld [vmem:[%s4 + $0x8] sm:$0x3f]
  %85 = vset.pattern.permute.xlu0 0
  %86 = vperm.xlu0 %85, %v82
  %v87 = vpop.permute.xlu0 %86
  %90 = vset.pattern.permute.xlu0 0
  %91 = vperm.xlu0 %90, %v83
  %v92 = vpop.permute.xlu0 %91
  %vm94 = vcmask 97280
  %v96 = vsel %vm94, %v80, 0
  %v99 = vsel %vm94, %v81, 0
  %vm101 = vcmask 1043456
  %v103 = vsel %vm101, %v79, 0
  %105 = vmatpush.msra.mxu0 0.0
  %106 = vmatpush.msra.mxu0 0.0
  %107 = vmatpush.msra.mxu0 0.0
  %108 = vmatpush.msra.mxu0 0.0
  %109 = vmatpush.msra.mxu0 0.0
  %110 = vmatpush.msra.mxu0 0.0
  %111 = vmatpush.msra.mxu0 0.0
  %112 = vmatpush.msra.mxu0 0.0
  %113 = vmatpush.msra.mxu0 0.0
  %114 = vmatpush.msra.mxu0 0.0
  %115 = vmatpush.msra.mxu0 0.0
  %116 = vmatpush.msra.mxu0 0.0
  %117 = vmatpush.msra.mxu0 0.0
  %118 = vmatpush.msra.mxu0 0.0
  %119 = vmatpush.msra.mxu0 %v103
  %120 = vmatpush.msra.mxu0 %v78
  %121 = vmatmul.f32.gmra.mxu0 %v96
  %v122 = vpop.f32.mrf.mxu0
  %v123 = vadd.f32 %v87, %v122
  %124 = vmatmul.f32.gmra.mxu0 %v99
  %v125 = vpop.f32.mrf.mxu0
  %v126 = vadd.f32 %v92, %v125
  %127 = vdwg.mxu0
  %v128 = vmax.f32 %v123, 0.0
  %v129 = vmax.f32 %v126, 0.0
  %v130 = vld [vmem:[%s5] sm:$0xff]
  %v131 = vld [vmem:[%s6] sm:$0xff]
  %133 = vset.pattern.permute.xlu0 0
  %134 = vperm.xlu0 %133, %v131
  %v135 = vpop.permute.xlu0 %134
  %vm137 = vcmask 113664
  %v139 = vsel %vm137, %v130, 0
  %vm141 = vcmask 1045504
  %v143 = vsel %vm141, %v129, 0
  %145 = vmatpush.msra.mxu0 0.0
  %146 = vmatpush.msra.mxu0 0.0
  %147 = vmatpush.msra.mxu0 0.0
  %148 = vmatpush.msra.mxu0 0.0
  %149 = vmatpush.msra.mxu0 0.0
  %150 = vmatpush.msra.mxu0 0.0
  %151 = vmatpush.msra.mxu0 0.0
  %152 = vmatpush.msra.mxu0 0.0
  %153 = vmatpush.msra.mxu0 0.0
  %154 = vmatpush.msra.mxu0 0.0
  %155 = vmatpush.msra.mxu0 0.0
  %156 = vmatpush.msra.mxu0 0.0
  %157 = vmatpush.msra.mxu0 0.0
  %158 = vmatpush.msra.mxu0 0.0
  %159 = vmatpush.msra.mxu0 %v143
  %160 = vmatpush.msra.mxu0 %v128
  %161 = vmatmul.f32.gmra.mxu0 %v139
  %v162 = vpop.f32.mrf.mxu0
  %v163 = vadd.f32 %v135, %v162
  %164 = vdwg.mxu0
  %v165 = vmax.f32 %v163, 0.0
  %v166 = vld [vmem:[%s7] sm:$0xff]
  %v167 = vld [vmem:[%s8] sm:$0xff]
  %169 = vset.pattern.permute.xlu0 0
  %170 = vperm.xlu0 %169, %v167
  %v171 = vpop.permute.xlu0 %170
  %vm173 = vcmask 64512
  %v175 = vsel %vm173, %v166, 0
  %177 = vmatpush.msra.mxu0 0.0
  %178 = vmatpush.msra.mxu0 0.0
  %179 = vmatpush.msra.mxu0 0.0
  %180 = vmatpush.msra.mxu0 0.0
  %181 = vmatpush.msra.mxu0 0.0
  %182 = vmatpush.msra.mxu0 0.0
  %183 = vmatpush.msra.mxu0 0.0
  %184 = vmatpush.msra.mxu0 0.0
  %185 = vmatpush.msra.mxu0 0.0
  %186 = vmatpush.msra.mxu0 0.0
  %187 = vmatpush.msra.mxu0 0.0
  %188 = vmatpush.msra.mxu0 0.0
  %189 = vmatpush.msra.mxu0 0.0
  %190 = vmatpush.msra.mxu0 0.0
  %191 = vmatpush.msra.mxu0 0.0
  %192 = vmatpush.msra.mxu0 %v165
  %193 = vmatmul.f32.gmra.mxu0 %v175
  %v194 = vpop.f32.mrf.mxu0
  %v195 = vadd.f32 %v171, %v194
  %196 = vdwg.mxu0
  %197 = vst [vmem:[%s9] sm:$0xff] %v195
  // Predicated region
  $region38: #{synthetic3layer_forward.1} parent=0 // pred_check
    _
  $region39: #{synthetic3layer_forward.1} parent=0 // pred_check_branch
    %199 = sbr.rel (0) target = $region41
  $region40: #{synthetic3layer_forward.1} parent=0 // pred_region
    _
  $region41: #{synthetic3layer_forward.1} parent=0 // pred_fallthru
    _
  // Predicated region
  $region42: #{synthetic3layer_forward.1} parent=0 // pred_check
    _
  $region43: #{synthetic3layer_forward.1} parent=0 // pred_check_branch
    %201 = sbr.rel (0) target = $region45
  $region44: #{synthetic3layer_forward.1} parent=0 // pred_region
    _
  $region45: #{synthetic3layer_forward.1} parent=0 // pred_fallthru
    _

</llo_original>
